<compile_context>
chip_gen: v7x
topology: tpu7x:2x2x1
jax: 0.10.0
libtpu: 0.0.40
codegen_flags: <defaults>
</compile_context>

<pallas_src>
import jax
import jax.numpy as jnp
from jax.experimental import pallas as pl
from jax.experimental.pallas import tpu as pltpu

_LANES = 128


def _sine_kernel(x_ref, o_ref):
    x = x_ref[...]
    if x.dtype == jnp.float32:
        o_ref[...] = jnp.sin(x)
    else:
        # Compute in f32 for sub-f32 floats (v5e has no bf16 VPU/EUP path;
        # matches torch's effective precision).
        # TODO(synk): benchmark native bf16 sin on v6e/v7x and drop this upcast
        # there if it is accurate enough and measurably faster.
        o_ref[...] = jnp.sin(x.astype(jnp.float32)).astype(o_ref.dtype)


def _vmem_capacity_bytes() -> int:
    """Physical VMEM of the local chip; assume the smallest (v7x) if unknown."""
    try:
        return int(pltpu.get_tpu_info().vmem_capacity_bytes)
    except Exception:
        return 64 << 20


def _sine_impl(x: jax.Array) -> jax.Array:
    orig_shape = x.shape
    in_dtype = jnp.dtype(x.dtype)

    # torch.sin promotes integral / bool inputs to a floating result.
    if not jnp.issubdtype(in_dtype, jnp.floating):
        x = x.astype(jnp.float32)
        out_dtype = jnp.dtype(jnp.float32)
        kernel_dtype = jnp.dtype(jnp.float32)
    elif in_dtype == jnp.float64:
        # TPU has no f64: compute in f32, cast back (documented precision loss).
        x = x.astype(jnp.float32)
        out_dtype = in_dtype
        kernel_dtype = jnp.dtype(jnp.float32)
    else:
        out_dtype = in_dtype
        kernel_dtype = in_dtype

    n = int(x.size)
    if n == 0:
        return x.astype(out_dtype)

    itemsize = kernel_dtype.itemsize
    sub = {1: 32, 2: 16, 4: 8}.get(itemsize, 8)  # sublane multiple per packing

    vmem_cap = _vmem_capacity_bytes()
    # Per-block element budget: ~8 MiB f32 compute footprint on 64 MiB-VMEM
    # chips (v7x), ~16 MiB on 128 MiB-VMEM chips (v5e/v6e).
    budget_elems = (2 << 20) if vmem_cap < (96 << 20) else (4 << 20)

    flat = x.reshape(-1)
    if n % _LANES == 0:
        # Aligned fast path: zero-copy lane-dense (rows, 128) slab.
        rows = n // _LANES
        slab = flat.reshape(rows, _LANES)
        budget_rows = max(sub, ((budget_elems // _LANES) // sub) * sub)
        if rows <= sub:
            tr = rows  # block == full array dims -> always legal
        else:
            # At least 2 grid steps so both v7x TensorCores get work.
            half = -(-rows // 2)
            tr = max(sub, (min(budget_rows, half) // sub) * sub)
        grid = (-(-rows // tr),)
        block_shape = (tr, _LANES)
        index_map = lambda i: (i, 0)
        block_elems = tr * _LANES
    else:
        # Ragged path: NO pad / slice.  View the flat array as a single (1, n)
        # row (free reshape) and tile the lane axis; Pallas masks the ragged
        # last block, so no extra HBM passes are paid.
        slab = flat.reshape(1, n)
        if n <= 8 * _LANES:
            blk = n  # block == full array dims -> legal even if not % 128
        else:
            half = -(-n // 2)  # >= 2 grid steps for TensorCore parallelism
            blk = max(_LANES, (min(budget_elems, half) // _LANES) * _LANES)
        grid = (-(-n // blk),)
        block_shape = (1, blk)
        index_map = lambda i: (0, i)
        block_elems = blk

    # VMEM budget: double-buffered in + out blocks, f32 compute intermediates,
    # plus headroom; never claim the last ~8 MiB of physical VMEM.
    block_bytes = block_elems * itemsize
    needed = 4 * block_bytes + 2 * block_elems * 4 + (4 << 20)
    vmem_limit = int(min(max(needed, 32 << 20), vmem_cap - (8 << 20)))

    out = pl.pallas_call(
        _sine_kernel,
        out_shape=jax.ShapeDtypeStruct(slab.shape, kernel_dtype),
        grid=grid,
        in_specs=[pl.BlockSpec(block_shape, index_map)],
        out_specs=pl.BlockSpec(block_shape, index_map),
        compiler_params=pltpu.CompilerParams(
            dimension_semantics=("parallel",),
            vmem_limit_bytes=vmem_limit,
        ),
    )(slab)

    out = out.reshape(orig_shape)
    if out.dtype != out_dtype:
        out = out.astype(out_dtype)
    return out


# jit so the reshapes around the pallas_call are metadata-only.
sine = jax.jit(_sine_impl)


if __name__ == "__main__":
    key = jax.random.PRNGKey(0)
    k0, k1, k2, k3 = jax.random.split(key, 4)

    # Primary example: small batch of activations (aligned fast path, grid=2).
    x = jax.random.normal(k0, (2, 4, 16, 16), dtype=jnp.float32)
    y = sine(x)
    jax.block_until_ready(y)
    assert y.shape == x.shape and y.dtype == x.dtype
    assert jnp.allclose(y, jnp.sin(x), atol=1e-6, rtol=1e-6)

    # Ragged tail, single full block (n = 231, not a multiple of 128).
    x_rag = jax.random.normal(k1, (7, 33), dtype=jnp.float32)
    y_rag = sine(x_rag)
    jax.block_until_ready(y_rag)
    assert y_rag.shape == x_rag.shape
    assert jnp.allclose(y_rag, jnp.sin(x_rag), atol=1e-6, rtol=1e-6)

    # Ragged, multi-block masked path (n = 1800 -> lane blocks of 896).
    x_rag2 = jax.random.normal(k2, (9, 200), dtype=jnp.float32)
    y_rag2 = sine(x_rag2)
    jax.block_until_ready(y_rag2)
    assert jnp.allclose(y_rag2, jnp.sin(x_rag2), atol=1e-6, rtol=1e-6)

    # bf16 path (f32 compute inside the kernel).
    x_bf = jax.random.normal(k3, (4, 8, 32), dtype=jnp.bfloat16)
    y_bf = sine(x_bf)
    jax.block_until_ready(y_bf)
    ref_bf = jnp.sin(x_bf.astype(jnp.float32)).astype(jnp.bfloat16)
    assert y_bf.shape == x_bf.shape and y_bf.dtype == x_bf.dtype
    assert jnp.allclose(
        y_bf.astype(jnp.float32), ref_bf.astype(jnp.float32), atol=1e-2, rtol=1e-2
    )

    # Integer input promotes to float32 (torch.sin semantics).
    x_int = jnp.arange(2 * 4 * 16, dtype=jnp.int32).reshape(2, 4, 16)
    y_int = sine(x_int)
    jax.block_until_ready(y_int)
    assert y_int.dtype == jnp.float32
    assert jnp.allclose(y_int, jnp.sin(x_int.astype(jnp.float32)), atol=1e-6)

    print("KERNEL_OK")
</pallas_src>

<mosaic_0001>
module attributes {stable_mosaic.version = 11 : i64} {
  func.func @_sine_kernel(%arg0: i32, %arg1: memref<8x128xf32, #tpu.memory_space<vmem>>, %arg2: memref<8x128xf32, #tpu.memory_space<vmem>>) attributes {dimension_semantics = [#tpu.dimension_semantics<parallel>], iteration_bounds = array<i64: 2>, scalar_prefetch = 0 : i64, scratch_operands = 0 : i64, tpu.core_type = #tpu.core_type<tc>, window_params = [{transform_indices = @transform_0, window_bounds = array<i64: 8, 128>}, {transform_indices = @transform_1, window_bounds = array<i64: 8, 128>}]} {
    %c0 = arith.constant 0 : index
    %c0_0 = arith.constant 0 : index
    %0 = vector.load %arg1[%c0, %c0_0] : memref<8x128xf32, #tpu.memory_space<vmem>>, vector<8x128xf32>
    %1 = math.sin %0 : vector<8x128xf32>
    %c0_1 = arith.constant 0 : index
    %c0_2 = arith.constant 0 : index
    %2 = vector.load %arg2[%c0_1, %c0_2] : memref<8x128xf32, #tpu.memory_space<vmem>>, vector<8x128xf32>
    tpu.vector_store %arg2[%c0_1, %c0_2], %1 {strides = array<i32>} : memref<8x128xf32, #tpu.memory_space<vmem>>, vector<8x128xf32>,
    return
  }
  func.func @transform_0(%arg0: i32) -> (i32, i32) {
    %c0_i32 = arith.constant 0 : i32
    %c0_i32_0 = arith.constant 0 : i32
    return %arg0, %c0_i32 : i32, i32
  }
  func.func @transform_1(%arg0: i32) -> (i32, i32) {
    %c0_i32 = arith.constant 0 : i32
    %c0_i32_0 = arith.constant 0 : i32
    return %arg0, %c0_i32 : i32, i32
  }
}

</mosaic_0001>

<llo_original>
// kernel: _sine_impl.1
$region0: #{_sine_impl.1}
  #allocation0 [shape = 'u32[]', space=smem, size = 0x4, offset = 0x4, fixed_abs, tag = 'smem constant byte address 0x4 - core index']
  #allocation1 [shape = 'u32[144,128]{1,0:T(1,128)}', space=vmem, size = 0x12000, scoped, tag = 'internal scratch']
  %s0 = inlined_call_operand.vmem [shape: f32[16,128], index: 0, kind: input, shape index: {}]
  %s1 = inlined_call_operand.vmem [shape: f32[16,128], index: 1, kind: output, shape index: {}]
  %s2 = sld [smem:[#allocation0]]
  $region37: #{_sine_impl.1} parent=0
    _
  %s4 = ssub.s32 1, %s2
  %s5 = scalar_select 0, %s4, %s2
  loop: start=0, step=1, limit=4
  $region2: #{_sine_impl.1} parent=0 // loop_pre_header
    _
  $region3: #{_sine_impl.1} parent=0 // loop_header
    %s7 = sphi 0, %s11
    %p8 = scmp.ge.s32.totalorder %s7, 4
    %s17 = sphi 0, %s19
    %s20 = sphi 0, %s17
    %s21 = sphi 0, %s20
    %s37 = sphi 0, %s21
    %s43 = sphi 0, %s45
    %s46 = sphi 0, %s43
    %s47 = sphi 0, %s46
    %s63 = sphi 0, %s47
  $region4: #{_sine_impl.1} parent=0 // loop_header_branch
    %10 = sbr.rel (%p8) target = $region8
  $region5: #{_sine_impl.1} parent=0 // loop_body
    %s12 = ssub.s32 %s7, 1
    %s13 = ssub.s32 %s7, 2
    %s14 = sadd.s32 %s7, 1
    %s15 = ssub.s32 %s7, %s14
    %p16 = scmp.eq.s32.totalorder %s15, 0
    %s18 = sadd.s32 %s17, 1
    %s19 = scalar_select %p16, %s17, %s18
    %p22 = pneg %p16
    %p23 = scmp.eq.s32.totalorder %s7, 1
    %p24 = por %p22, %p23
    %p25 = scmp.ne.s32.totalorder %s17, %s20
    %p26 = scmp.eq.s32.totalorder %s7, 0
    %p27 = por %p25, %p26
    %p28 = scmp.ne.s32.totalorder %s17, %s20
    %p29 = scmp.eq.s32.totalorder %s12, 1
    %p30 = por %p28, %p29
    %p31 = scmp.ne.s32.totalorder %s20, %s21
    %p32 = scmp.eq.s32.totalorder %s12, 0
    %p33 = por %p31, %p32
    %p34 = scmp.ne.s32.totalorder %s20, %s21
    %p35 = scmp.eq.s32.totalorder %s13, 1
    %p36 = por %p34, %p35
    %p38 = scmp.ne.s32.totalorder %s21, %s37
    %p39 = scmp.eq.s32.totalorder %s13, 0
    %p40 = por %p38, %p39
    %s41 = ssub.s32 %s7, %s14
    %p42 = scmp.eq.s32.totalorder %s41, 0
    %s44 = sadd.s32 %s43, 1
    %s45 = scalar_select %p42, %s43, %s44
    %p48 = pneg %p42
    %p49 = scmp.eq.s32.totalorder %s7, 1
    %p50 = por %p48, %p49
    %p51 = scmp.ne.s32.totalorder %s43, %s46
    %p52 = scmp.eq.s32.totalorder %s7, 0
    %p53 = por %p51, %p52
    %p54 = scmp.ne.s32.totalorder %s43, %s46
    %p55 = scmp.eq.s32.totalorder %s12, 1
    %p56 = por %p54, %p55
    %p57 = scmp.ne.s32.totalorder %s46, %s47
    %p58 = scmp.eq.s32.totalorder %s12, 0
    %p59 = por %p57, %p58
    %p60 = scmp.ne.s32.totalorder %s46, %s47
    %p61 = scmp.eq.s32.totalorder %s13, 1
    %p62 = por %p60, %p61
    %p64 = scmp.ne.s32.totalorder %s47, %s63
    %p65 = scmp.eq.s32.totalorder %s13, 0
    %p66 = por %p64, %p65
    %p67 = scmp.le.s32.totalorder 1, %s7
    %p68 = scmp.lt.s32.totalorder %s7, 3
    %p69 = pnand %p67, %p68
    %p70 = pneg %p69
    // Predicated region
    $region9: #{_sine_impl.1} parent=5 // pred_check
      _
    $region10: #{_sine_impl.1} parent=5 // pred_check_branch
      %72 = sbr.rel (%p69) target = $region12
    $region11: #{_sine_impl.1} parent=5 // pred_region
      %s73 = ssub.s32 %s7, 1
    $region12: #{_sine_impl.1} parent=5 // pred_fallthru
      _
    %p74 = scmp.lt.s32.totalorder %s7, 2
    // Predicated region
    $region13: #{_sine_impl.1} parent=5 // pred_check
      %p75 = pneg %p74
    $region14: #{_sine_impl.1} parent=5 // pred_check_branch
      %77 = sbr.rel (%p75) target = $region16
    $region15: #{_sine_impl.1} parent=5 // pred_region
      // Predicated region
      $region17: #{_sine_impl.1} parent=15 // pred_check
        %p78 = pneg %p27
      $region18: #{_sine_impl.1} parent=15 // pred_check_branch
        %80 = sbr.rel (%p78) target = $region20
      $region19: #{_sine_impl.1} parent=15 // pred_region
        %p81 = scmp.lt.s32.totalorder %s7, 1
        %s82 = scalar_select %p81, %s7, 1
        %s83 = smul.addr %s82, 8
        %s84 = scalar_lea.vmem %s0, %s83
      $region20: #{_sine_impl.1} parent=15 // pred_fallthru
        _
    $region16: #{_sine_impl.1} parent=5 // pred_fallthru
      _
    %p85 = scmp.le.s32.totalorder 1, %s7
    %p86 = scmp.lt.s32.totalorder %s7, 3
    %p87 = pnand %p85, %p86
    %p88 = pneg %p87
    // Predicated region
    $region21: #{_sine_impl.1} parent=5 // pred_check
      _
    $region22: #{_sine_impl.1} parent=5 // pred_check_branch
      %90 = sbr.rel (%p87) target = $region24
    $region23: #{_sine_impl.1} parent=5 // pred_region
      %s91 = ssub.s32 %s7, 1
      %p92 = scmp.lt.s32.totalorder %s12, 1
      %s93 = scalar_select %p92, %s12, 1
      %s94 = smul.addr %s93, 8
      %s95 = scalar_lea.vmem %s0, %s94
      %p96 = pneg %p33
      %p97 = pneg %p30
      %p98 = pneg %p59
      %p99 = pneg %p56
      %p100 = scmp.lt.s32.totalorder %s12, 1
      %s101 = scalar_select %p100, %s12, 1
      %s102 = smul.addr %s101, 8
      %s103 = scalar_lea.vmem %s1, %s102
      %p104 = scmp.lt.s32.totalorder %s12, 1
      %s105 = scalar_select %p104, %s12, 1
      %s106 = smul.addr %s105, 8
      %s107 = scalar_lea.vmem %s0, %s106
      %p108 = scmp.lt.s32.totalorder %s12, 1
      %s109 = scalar_select %p108, %s12, 1
      %s110 = smul.addr %s109, 8
      %s111 = scalar_lea.vmem %s1, %s110
      %v112 = vld [vmem:[%s107] sm:$0xff]
      %v113 = vand.u32 2147483647, %v112
      %vm114 = vcmp.le.f32.partialorder %v113, 0.7853982
      %vm115 = vcmp.lt.s32.totalorder %v112, 0
      %v116 = vand.u32 %v112, 2139095040
      %v117 = vshrl.u32 %v116, 23
      %v118 = vsub.s32 %v117, 127
      %v119 = vand.u32 2147483647, %v112
      %v120 = vand.u32 %v119, 8388607
      %v121 = vor.u32 %v120, 8388608
      %v122 = vsub.s32 0, %v121
      %v123 = vadd.s32 %v118, 1
      %vm124 = vcmp.gt.s32.totalorder %v123, 0
      %v125 = vsel %vm124, %v123, 0
      %v126 = vshrl.u32 %v125, 5
      %v127 = vand.u32 %v125, 31
      %v128 = vsub.s32 32, %v127
      %v129 = vshrl.u32 683565275, %v128
      %v130 = vshll.u32 683565275, %v127
      %v131 = vshrl.u32 2475754826, %v128
      %v132 = vor.u32 %v130, %v131
      %v133 = vshll.u32 2475754826, %v127
      %v134 = vshrl.u32 2131351028, %v128
      %v135 = vor.u32 %v133, %v134
      %v136 = vshll.u32 2131351028, %v127
      %v137 = vshrl.u32 2102212464, %v128
      %v138 = vor.u32 %v136, %v137
      %v139 = vshll.u32 2102212464, %v127
      %v140 = vshrl.u32 920167782, %v128
      %v141 = vor.u32 %v139, %v140
      %v142 = vshll.u32 920167782, %v127
      %v143 = vshrl.u32 1326507024, %v128
      %v144 = vor.u32 %v142, %v143
      %vm145 = vcmp.lt.s32.totalorder %v126, 1
      %vm146 = vcmp.lt.s32.totalorder %v126, 2
      %vm147 = vcmp.lt.s32.totalorder %v126, 3
      %vm148 = vcmp.lt.s32.totalorder %v126, 4
      %v149 = vsel %vm145, %v129, %v132
      %v150 = vsel %vm148, %v138, 2102212464
      %v151 = vsel %vm147, %v135, %v150
      %v152 = vsel %vm146, %v149, %v151
      %v153 = vsel %vm145, %v132, %v135
      %v154 = vsel %vm148, %v141, 920167782
      %v155 = vsel %vm147, %v138, %v154
      %v156 = vsel %vm146, %v153, %v155
      %v157 = vsel %vm145, %v135, %v138
      %v158 = vsel %vm148, %v144, 1326507024
      %v159 = vsel %vm147, %v141, %v158
      %v160 = vsel %vm146, %v157, %v159
      %v161 = vshll.u32 %v121, 8
      %v162 = vmul.u32.u64.compose %v161, %v160
      %v163 = vextract.low.u32 %v162
      %v164 = vextract.high.u32 %v162
      %v165 = vmul.u32.u64.compose %v161, %v156
      %v166 = vextract.low.u32 %v165
      %v167 = vextract.high.u32 %v165
      %v168 = vmul.u32 %v161, %v152
      %v169 = vadd.s32 %v164, %v166
      %vm170 = vc.u32 %v164, %v166
      %v171 = vadd.s32 %v167, 1
      %v172 = vsel %vm170, %v171, %v167
      %v173 = vadd.s32 %v168, %v172
      %v174 = vadd.s32 %v173, 536870912
      %v175 = vshrl.u32 %v174, 30
      %v176 = vshll.u32 %v175, 30
      %v177 = vsub.s32 %v173, %v176
      %vm178 = vcmp.lt.s32.totalorder %v177, 0
      %v179 = vsub.s32 0, %v177
      %v180 = vsel %vm178, %v179, %v177
      %v181 = vclz %v180
      %v182 = vsub.s32 %v181, 2
      %vm183 = vcmp.gt.s32.totalorder 0, %v182
      %v184 = vsel %vm183, 0, %v182
      %v185 = vsub.s32 32, %v184
      %v186 = vshll.u32 %v177, %v184
      %v187 = vshrl.u32 %v169, %v185
      %v188 = vor.u32 %v186, %v187
      %v189 = vsub.s32 4294967266, %v184
      %v190 = vadd.s32 %v189, 127
      %v191 = vshll.u32 %v190, 23
      %v192 = vor.u32 4788187, %v191
      %v193 = vand.u32 2147483647, %v192
      %v195 = vcvt.s32.f32 %v188
      %v196 = vmul.f32 %v195, %v193
      %v197 = vxor.u32 %v196, 2147483648
      %v198 = vsel %vm115, %v197, %v196
      %v199 = vsub.s32 4, %v175
      %v200 = vsel %vm115, %v199, %v175
      %v201 = vsel %vm114, %v112, %v198
      %v202 = vsel %vm114, 0, %v200
      %v203 = vcosq.f32.pop %v201
      %v204 = vsinq.f32.pop %v201
      %vm205 = vweird.f32 %v112
      %v206 = vadd.s32 %v202, 3
      %v207 = vand.u32 %v206, 3
      %vm208 = vcmp.lt.s32.totalorder %v207, 2
      %vm209 = vcmp.eq.s32.totalorder %v207, 0
      %v210 = vxor.u32 %v204, 2147483648
      %v211 = vsel %vm209, %v203, %v210
      %vm212 = vcmp.eq.s32.totalorder %v207, 2
      %v213 = vxor.u32 %v203, 2147483648
      %v214 = vsel %vm212, %v213, %v204
      %v215 = vsel %vm208, %v211, %v214
      %v216 = vsel %vm205, nan, %v215
      %217 = vst [vmem:[%s111] sm:$0xff] %v216
      %p218 = scmp.lt.s32.totalorder %s12, 1
      %s219 = scalar_select %p218, %s12, 1
      %s220 = smul.addr %s219, 8
      %s221 = scalar_lea.vmem %s1, %s220
      // Predicated region
      $region25: #{_sine_impl.1} parent=23 // pred_check
        %p222 = pneg %p56
      $region26: #{_sine_impl.1} parent=23 // pred_check_branch
        %224 = sbr.rel (%p222) target = $region28
      $region27: #{_sine_impl.1} parent=23 // pred_region
        _
      $region28: #{_sine_impl.1} parent=23 // pred_fallthru
        _
    $region24: #{_sine_impl.1} parent=5 // pred_fallthru
      _
    %p225 = scmp.le.s32.totalorder 2, %s7
    // Predicated region
    $region29: #{_sine_impl.1} parent=5 // pred_check
      %p226 = pneg %p225
    $region30: #{_sine_impl.1} parent=5 // pred_check_branch
      %228 = sbr.rel (%p226) target = $region32
    $region31: #{_sine_impl.1} parent=5 // pred_region
      %s229 = ssub.s32 %s7, 2
      // Predicated region
      $region33: #{_sine_impl.1} parent=31 // pred_check
        %p230 = pneg %p62
      $region34: #{_sine_impl.1} parent=31 // pred_check_branch
        %232 = sbr.rel (%p230) target = $region36
      $region35: #{_sine_impl.1} parent=31 // pred_region
        %p233 = scmp.lt.s32.totalorder %s13, 1
        %s234 = scalar_select %p233, %s13, 1
        %s235 = smul.addr %s234, 8
        %s236 = scalar_lea.vmem %s1, %s235
      $region36: #{_sine_impl.1} parent=31 // pred_fallthru
        _
    $region32: #{_sine_impl.1} parent=5 // pred_fallthru
      _
  $region6: #{_sine_impl.1} parent=0 // loop_footer
    %s11 = sadd.s32 1, %s7
  $region7: #{_sine_impl.1} parent=0 // loop_footer_branch
    %6 = sbr.rel target = $region3
  $region8: #{_sine_impl.1} parent=0 // loop_exit
    _

</llo_original>
